<compile_context>
chip_gen: v5e
topology: v5e:2x2
jax: 0.10.0
libtpu: 0.0.40
codegen_flags: <defaults>
</compile_context>

<pallas_src>
import functools

import jax
import jax.numpy as jnp
from jax.experimental import pallas as pl
from jax.experimental.pallas import tpu as pltpu


# ---------------------------------------------------------------------------
# helpers
# ---------------------------------------------------------------------------
def _fold_bn(gamma, beta, mean, var, eps=1e-5):
    scale = gamma / jnp.sqrt(var + eps)
    bias = beta - mean * scale
    return scale, bias


def _col_interp_matrices(win, s):
    """(Win, Wout) right-multiplication matrices for bilinear / nearest column
    upsampling by integer factor s (matches F.interpolate, align_corners=False)."""
    wout = win * s
    v = jnp.arange(wout, dtype=jnp.float32)
    src = jnp.maximum((v + 0.5) / s - 0.5, 0.0)
    i0 = jnp.minimum(jnp.floor(src).astype(jnp.int32), win - 1)
    i1 = jnp.minimum(i0 + 1, win - 1)
    frac = src - i0.astype(jnp.float32)
    rw = (jax.nn.one_hot(i0, win, dtype=jnp.float32) * (1.0 - frac)[:, None]
          + jax.nn.one_hot(i1, win, dtype=jnp.float32) * frac[:, None])
    nw = jax.nn.one_hot(v.astype(jnp.int32) // s, win, dtype=jnp.float32)
    return rw.T, nw.T                       # (Win, Wout) each


@functools.lru_cache(maxsize=None)
def _vmem_limit_bytes():
    """Generation-aware VMEM limit: ~46 MiB on v7x (64 MiB/TC), ~92-100 MiB on v5e/v6e."""
    try:
        cap = int(pltpu.get_tpu_info().vmem_capacity_bytes)
    except Exception:
        cap = 128 * 1024 * 1024
    return min(int(cap * 0.72), 100 * 1024 * 1024)


@functools.lru_cache(maxsize=None)
def _roll_like_jnp():
    """True if pltpu.roll follows jnp.roll semantics (out[i] = x[(i - shift) % n]).
    A one-off tiny probe so the fuse kernel's tap shifts are direction-proof."""
    def k(x_ref, o_ref):
        o_ref[...] = pltpu.roll(x_ref[...], 1, 1)
    x = jnp.tile(jnp.arange(128, dtype=jnp.float32)[None, :], (8, 1))
    y = pl.pallas_call(k, out_shape=jax.ShapeDtypeStruct((8, 128), jnp.float32))(x)
    return bool(y[0, 1] == 0.0)


_TAPS = tuple((dy, dx) for dy in range(3) for dx in range(3))


# ---------------------------------------------------------------------------
# Kernel 1: 1x1 conv (folded BN) + ReLU in NCHW orientation (level 0)
# ---------------------------------------------------------------------------
def _pointwise_kernel(x_ref, w_ref, b_ref, o_ref):
    # x: (1, Cin, TN)   w: (Cout, Cin) bf16   b: (Cout, 1)   o: (1, Cout, TN)
    y = jnp.dot(w_ref[...], x_ref[0].astype(jnp.bfloat16),
                preferred_element_type=jnp.float32)
    o_ref[...] = jnp.maximum(y + b_ref[...], 0.0)[None].astype(o_ref.dtype)


def pointwise_bn_relu(x_nchw, w_folded, bias):
    B, Cin, H, W = x_nchw.shape
    Cout = w_folded.shape[0]
    HW = H * W
    # big lane-dense spatial tiles: the 1x1 conv is memory-bound, so the tile is
    # sized so per-grid-step overhead is negligible (cap keeps blocks a few MB).
    TN = min(8192, pl.cdiv(HW, 128) * 128)
    hw_pad = pl.cdiv(HW, TN) * TN
    x2 = x_nchw.reshape(B, Cin, HW)
    if hw_pad != HW:
        x2 = jnp.pad(x2, ((0, 0), (0, 0), (0, hw_pad - HW)))
    out = pl.pallas_call(
        _pointwise_kernel,
        out_shape=jax.ShapeDtypeStruct((B, Cout, hw_pad), x_nchw.dtype),
        grid=(B, hw_pad // TN),
        in_specs=[
            pl.BlockSpec((1, Cin, TN), lambda b, t: (b, 0, t)),
            pl.BlockSpec((Cout, Cin), lambda b, t: (0, 0)),
            pl.BlockSpec((Cout, 1), lambda b, t: (0, 0)),
        ],
        out_specs=pl.BlockSpec((1, Cout, TN), lambda b, t: (b, 0, t)),
        compiler_params=pltpu.CompilerParams(
            dimension_semantics=("parallel", "parallel"),
            vmem_limit_bytes=_vmem_limit_bytes()),
    )(x2, w_folded.astype(jnp.bfloat16), bias.reshape(Cout, 1))
    if hw_pad != HW:
        out = out[:, :, :HW]
    return out.reshape(B, Cout, H, W)


# ---------------------------------------------------------------------------
# Kernel 2: fused 1x1 conv (folded BN) + ReLU + MixUpSample (levels 1..3)
# ---------------------------------------------------------------------------
def _proj_mixupsample_kernel(x_ref, w_ref, b_ref, rwnw_ref, o_ref, *,
                             scale, hin, win, wout, tc):
    # x: (1, Cin, Hin*Win)    w: (TC, Cin) bf16    b: (TC, 1)
    # rwnw: (Win, 2*Wout) bf16 = [mixing * bilinear | (1-mixing) * nearest]
    # o: (1, TC*Hin, scale, Wout)  (phase-major; wrapper reshape to NCHW is free)
    x = x_ref[0].astype(jnp.bfloat16)
    p = jnp.dot(w_ref[...], x, preferred_element_type=jnp.float32)      # (TC, Hin*Win)
    p = jnp.maximum(p + b_ref[...], 0.0)
    p2 = p.reshape(tc * hin, win).astype(jnp.bfloat16)                  # (TC*Hin, Win)

    # column (W) interpolation: bilinear & nearest paths in ONE MXU matmul,
    # with the learned `mixing` scalar already folded into the matrix.
    z = jnp.dot(p2, rwnw_ref[...], preferred_element_type=jnp.float32)  # (TC*Hin, 2*Wout)
    zb = z[:, :wout]               # bilinear-in-W, pre-scaled by mixing
    zn = z[:, wout:]               # nearest-in-W,  pre-scaled by (1 - mixing)

    # clamped row neighbours for the bilinear row interpolation
    if hin > 1:
        zb3 = zb.reshape(tc, hin, wout)
        zb_up = jnp.concatenate([zb3[:, :1], zb3[:, :-1]], axis=1).reshape(tc * hin, wout)
        zb_dn = jnp.concatenate([zb3[:, 1:], zb3[:, -1:]], axis=1).reshape(tc * hin, wout)
    else:
        zb_up = zb
        zb_dn = zb

    # row (H) interpolation per output phase; each phase is stored straight into
    # its slot of the (..., scale, Wout) output block: no interleave relayout,
    # only one phase of intermediates live at a time.
    for ph in range(scale):
        f = (ph + 0.5) / scale - 0.5
        if f >= 0.0:
            bil = (1.0 - f) * zb + f * zb_dn
        else:
            a = 1.0 + f
            bil = (1.0 - a) * zb_up + a * zb
        y = bil + zn                                       # nearest row == same row
        o_ref[:, :, pl.ds(ph, 1), :] = y[None, :, None, :].astype(o_ref.dtype)


def proj_mixupsample(x_nchw, w_folded, bias, mixing, scale):
    B, Cin, Hin, Win = x_nchw.shape
    Cout = w_folded.shape[0]
    Hout, Wout = Hin * scale, Win * scale
    if Cout % 128 == 0:
        TC = 128
    elif Cout % 64 == 0:
        TC = 64
    elif Cout % 32 == 0:
        TC = 32
    else:
        TC = Cout
    rwT, nwT = _col_interp_matrices(Win, scale)
    m = jnp.asarray(mixing, jnp.float32)
    rwnw = jnp.concatenate([m * rwT, (1.0 - m) * nwT], axis=1).astype(jnp.bfloat16)
    kernel = functools.partial(_proj_mixupsample_kernel, scale=scale,
                               hin=Hin, win=Win, wout=Wout, tc=TC)
    out = pl.pallas_call(
        kernel,
        out_shape=jax.ShapeDtypeStruct((B, Cout * Hin, scale, Wout), x_nchw.dtype),
        grid=(B, Cout // TC),
        in_specs=[
            pl.BlockSpec((1, Cin, Hin * Win), lambda b, c: (b, 0, 0)),
            pl.BlockSpec((TC, Cin), lambda b, c: (c, 0)),
            pl.BlockSpec((TC, 1), lambda b, c: (c, 0)),
            pl.BlockSpec((Win, 2 * Wout), lambda b, c: (0, 0)),
        ],
        out_specs=pl.BlockSpec((1, TC * Hin, scale, Wout), lambda b, c: (b, c, 0, 0)),
        compiler_params=pltpu.CompilerParams(
            dimension_semantics=("parallel", "parallel"),
            vmem_limit_bytes=_vmem_limit_bytes()),
    )(x_nchw.reshape(B, Cin, Hin * Win), w_folded.astype(jnp.bfloat16),
      bias.reshape(Cout, 1), rwnw)
    # TODO(synk): add an Hin row-strip grid axis (with a 1-row halo) so the
    # output block / intermediates stay within a few MB on v7x at production sizes.
    return out.reshape(B, Cout, Hout, Wout)


# ---------------------------------------------------------------------------
# Kernel 3: fuse = conv3x3 (pad=1, folded BN) + ReLU
#   - no in-VMEM channel concat / zero-row padding: per-input partial matmuls
#   - tap shifts via pltpu.roll (XLU), out-of-image taps zeroed by iota masks
# ---------------------------------------------------------------------------
def _fuse_conv3x3_kernel(*refs, n_in, hgt, wdt, cout, roll_sign):
    x_refs = refs[:n_in]
    w_ref, b_ref, o_ref = refs[n_in], refs[n_in + 1], refs[n_in + 2]
    hw = hgt * wdt

    xs = [r[0].astype(jnp.bfloat16) for r in x_refs]          # (Cdec, HW) each

    pos = jax.lax.broadcasted_iota(jnp.int32, (1, hw), 1)
    row = pos // wdt
    col = pos - row * wdt

    acc = jnp.zeros((cout, hw), jnp.float32)
    for t, (dy, dx) in enumerate(_TAPS):
        # channel concat is never materialized: per-input partial matmuls
        res = jnp.dot(w_ref[t, 0, :, :], xs[0], preferred_element_type=jnp.float32)
        for i in range(1, n_in):
            res = res + jnp.dot(w_ref[t, i, :, :], xs[i],
                                preferred_element_type=jnp.float32)
        off = (dy - 1) * wdt + (dx - 1)   # flat source offset of this tap
        if off != 0:
            res = pltpu.roll(res, (roll_sign * off) % hw, 1)
        # Zero contributions whose source pixel falls outside the image.  These
        # row/col masks also cover every lane that wrapped around in the roll
        # (the only wrap sites are y==0 / y==H-1 rows and x==0 / x==W-1 columns).
        ok = None
        if dy == 0:
            ok = row > 0
        elif dy == 2:
            ok = row < hgt - 1
        if dx == 0:
            ok = (col > 0) if ok is None else jnp.logical_and(ok, col > 0)
        elif dx == 2:
            ok = (col < wdt - 1) if ok is None else jnp.logical_and(ok, col < wdt - 1)
        if ok is not None:
            res = jnp.where(ok, res, 0.0)
        acc = acc + res
    o_ref[...] = jnp.maximum(acc + b_ref[...], 0.0)[None].astype(o_ref.dtype)


def fuse_conv3x3_bn_relu(maps_nchw, w9_folded, bias):
    n_in = len(maps_nchw)
    B, Cdec, H, W = maps_nchw[0].shape
    Cout = w9_folded.shape[1]
    HW = H * W
    # (9, Cout, n_in*Cdec) -> (9, n_in, Cout, Cdec): per-tap / per-input weight
    # slabs are contiguous, so the kernel never slices the K dim across lanes.
    w = (w9_folded.reshape(9, Cout, n_in, Cdec)
         .transpose(0, 2, 1, 3).astype(jnp.bfloat16))
    kernel = functools.partial(_fuse_conv3x3_kernel, n_in=n_in, hgt=H, wdt=W,
                               cout=Cout, roll_sign=-1 if _roll_like_jnp() else 1)
    in_specs = ([pl.BlockSpec((1, Cdec, HW), lambda b: (b, 0, 0))] * n_in
                + [pl.BlockSpec((9, n_in, Cout, Cdec), lambda b: (0, 0, 0, 0)),
                   pl.BlockSpec((Cout, 1), lambda b: (0, 0))])
    out = pl.pallas_call(
        kernel,
        out_shape=jax.ShapeDtypeStruct((B, Cout, HW), maps_nchw[0].dtype),
        grid=(B,),
        in_specs=in_specs,
        out_specs=pl.BlockSpec((1, Cout, HW), lambda b: (b, 0, 0)),
        compiler_params=pltpu.CompilerParams(
            dimension_semantics=("parallel",),
            vmem_limit_bytes=_vmem_limit_bytes()),
    )(*[m.reshape(B, Cdec, HW) for m in maps_nchw],
      w, bias.reshape(Cout, 1))
    # TODO(synk): strip-tile over H (grid (B, H//TH) + 1-row halo via manual DMA)
    # and optionally tile Cout so the slabs/acc fit v7x's 64 MiB VMEM at
    # production sizes; also store the per-level maps in bf16 to halve their
    # HBM round-trip.
    return out.reshape(B, Cout, H, W)


# ---------------------------------------------------------------------------
# Parameters (deterministic, synthetic; inference-mode BN folded)
# ---------------------------------------------------------------------------
def make_params(key, encoder_dim, decoder_dim):
    params = {"mlp": [], "fuse": {}}
    for cin in encoder_dim:
        key, k1, k2, k3, k4, k5 = jax.random.split(key, 6)
        w = 0.05 * jax.random.normal(k1, (decoder_dim, cin), jnp.float32)
        gamma = 1.0 + 0.1 * jax.random.normal(k2, (decoder_dim,), jnp.float32)
        beta = 0.05 * jax.random.normal(k3, (decoder_dim,), jnp.float32)
        mean = 0.02 * jax.random.normal(k4, (decoder_dim,), jnp.float32)
        var = 1.0 + 0.1 * jax.random.uniform(k5, (decoder_dim,), jnp.float32)
        scale, bias = _fold_bn(gamma, beta, mean, var)
        params["mlp"].append({
            "w": w * scale[:, None],            # BN scale folded into weights
            "b": bias,
            "mixing": jnp.float32(0.5),         # nn.Parameter(torch.tensor(0.5))
        })
    cin_total = len(encoder_dim) * decoder_dim
    key, k1, k2, k3, k4, k5 = jax.random.split(key, 6)
    w = 0.05 * jax.random.normal(k1, (3, 3, cin_total, decoder_dim), jnp.float32)
    gamma = 1.0 + 0.1 * jax.random.normal(k2, (decoder_dim,), jnp.float32)
    beta = 0.05 * jax.random.normal(k3, (decoder_dim,), jnp.float32)
    mean = 0.02 * jax.random.normal(k4, (decoder_dim,), jnp.float32)
    var = 1.0 + 0.1 * jax.random.uniform(k5, (decoder_dim,), jnp.float32)
    scale, bias = _fold_bn(gamma, beta, mean, var)
    w9 = jnp.transpose(w, (0, 1, 3, 2)).reshape(9, decoder_dim, cin_total)
    params["fuse"] = {"w9": w9 * scale[None, :, None], "b": bias}
    return params


def daformer_decoder_forward(features_nchw, params):
    """features: list of (B, C_i, H_i, W_i) NCHW; returns (x, out) in NCHW."""
    out = []
    for i, f in enumerate(features_nchw):
        p = params["mlp"][i]
        if i == 0:
            y = pointwise_bn_relu(f, p["w"], p["b"])
        else:
            y = proj_mixupsample(f, p["w"], p["b"], p["mixing"], 2 ** i)
        out.append(y)
    pf = params["fuse"]
    x = fuse_conv3x3_bn_relu(out, pf["w9"], pf["b"])
    return x, out


# ---------------------------------------------------------------------------
# plain-JAX reference (same math, f32) for a numerical self-check
# ---------------------------------------------------------------------------
def _ref_up_nearest(x, s):
    _, _, H, W = x.shape
    ih = jnp.arange(H * s) // s
    iw = jnp.arange(W * s) // s
    return x[:, :, ih, :][:, :, :, iw]


def _ref_up_bilinear(x, s):
    _, _, H, W = x.shape

    def coords(L):
        j = jnp.arange(L * s, dtype=jnp.float32)
        src = jnp.maximum((j + 0.5) / s - 0.5, 0.0)
        i0 = jnp.minimum(jnp.floor(src).astype(jnp.int32), L - 1)
        i1 = jnp.minimum(i0 + 1, L - 1)
        return i0, i1, src - i0.astype(jnp.float32)

    h0, h1, fh = coords(H)
    w0, w1, fw = coords(W)
    xh = (x[:, :, h0, :] * (1.0 - fh)[None, None, :, None]
          + x[:, :, h1, :] * fh[None, None, :, None])
    return (xh[:, :, :, w0] * (1.0 - fw)[None, None, None, :]
            + xh[:, :, :, w1] * fw[None, None, None, :])


def _reference_forward(features_nchw, params):
    outs = []
    for i, f in enumerate(features_nchw):
        p = params["mlp"][i]
        y = jnp.einsum("oc,bchw->bohw", p["w"], f) + p["b"][None, :, None, None]
        y = jnp.maximum(y, 0.0)
        if i != 0:
            s = 2 ** i
            y = (p["mixing"] * _ref_up_bilinear(y, s)
                 + (1.0 - p["mixing"]) * _ref_up_nearest(y, s))
        outs.append(y)
    cat = jnp.concatenate(outs, axis=1)
    B, _, H, W = cat.shape
    xp = jnp.pad(cat, ((0, 0), (0, 0), (1, 1), (1, 1)))
    w9, b = params["fuse"]["w9"], params["fuse"]["b"]
    acc = jnp.zeros((B, w9.shape[1], H, W), jnp.float32)
    for t, (dy, dx) in enumerate(_TAPS):
        acc = acc + jnp.einsum("oc,bchw->bohw", w9[t],
                               xp[:, :, dy:dy + H, dx:dx + W])
    x = jnp.maximum(acc + b[None, :, None, None], 0.0)
    return x, outs


if __name__ == "__main__":
    B = 2
    encoder_dim = [8, 16, 24, 32]
    decoder_dim = 32
    H0 = W0 = 16

    key = jax.random.PRNGKey(0)
    key, *fkeys = jax.random.split(key, 1 + len(encoder_dim))
    features = []
    for i, (c, fk) in enumerate(zip(encoder_dim, fkeys)):
        h, w = H0 // (2 ** i), W0 // (2 ** i)
        features.append(jax.random.normal(fk, (B, c, h, w), jnp.float32))

    key, pkey = jax.random.split(key)
    params = make_params(pkey, encoder_dim, decoder_dim)

    x, out = daformer_decoder_forward(features, params)
    x = jax.block_until_ready(x)
    out = [jax.block_until_ready(o) for o in out]

    assert x.shape == (B, decoder_dim, H0, W0), x.shape
    for o in out:
        assert o.shape == (B, decoder_dim, H0, W0), o.shape
    assert bool(jnp.all(jnp.isfinite(x)))

    # numerical check against a plain-JAX (f32) reference of the same module;
    # tolerance covers the bf16 MXU operands used inside the kernels.
    x_ref, out_ref = _reference_forward(features, params)
    for a, b_ in zip(out, out_ref):
        assert bool(jnp.allclose(a, b_, atol=4e-2, rtol=4e-2)), \
            float(jnp.max(jnp.abs(a - b_)))
    assert bool(jnp.allclose(x, x_ref, atol=4e-2, rtol=4e-2)), \
        float(jnp.max(jnp.abs(x - x_ref)))

    print("KERNEL_OK")
</pallas_src>

<mosaic_0001>
module attributes {stable_mosaic.version = 11 : i64} {
  func.func @_pointwise_kernel(%arg0: i32, %arg1: i32, %arg2: memref<1x8x256xf32, #tpu.memory_space<vmem>>, %arg3: memref<32x8xbf16, #tpu.memory_space<vmem>>, %arg4: memref<32x1xf32, #tpu.memory_space<vmem>>, %arg5: memref<1x32x256xf32, #tpu.memory_space<vmem>>) attributes {dimension_semantics = [#tpu.dimension_semantics<parallel>, #tpu.dimension_semantics<parallel>], iteration_bounds = array<i64: 2, 1>, scalar_prefetch = 0 : i64, scratch_operands = 0 : i64, tpu.core_type = #tpu.core_type<tc>, window_params = [{transform_indices = @transform_0, window_bounds = array<i64: 1, 8, 256>}, {pipeline_mode = #tpu.pipeline_mode<synchronous>, transform_indices = @transform_1, window_bounds = array<i64: 32, 8>}, {pipeline_mode = #tpu.pipeline_mode<synchronous>, transform_indices = @transform_2, window_bounds = array<i64: 32, 1>}, {transform_indices = @transform_3, window_bounds = array<i64: 1, 32, 256>}]} {
    %c0 = arith.constant 0 : index
    %c0_0 = arith.constant 0 : index
    %0 = vector.load %arg3[%c0, %c0_0] : memref<32x8xbf16, #tpu.memory_space<vmem>>, vector<32x8xbf16>
    %c0_1 = arith.constant 0 : index
    %c0_2 = arith.constant 0 : index
    %c0_3 = arith.constant 0 : index
    %1 = vector.load %arg2[%c0_1, %c0_2, %c0_3] : memref<1x8x256xf32, #tpu.memory_space<vmem>>, vector<1x8x256xf32>
    %2 = vector.shape_cast %1 : vector<1x8x256xf32> to vector<8x256xf32>
    %3 = arith.truncf %2 : vector<8x256xf32> to vector<8x256xbf16>
    %cst = arith.constant dense<0.000000e+00> : vector<32x256xf32>
    %4 = tpu.matmul %0, %3, %cst {dimension_numbers = #tpu.dot_dimension_numbers<[1], [0], [0], [1], [0, 0, 1, 1], [], []>} : vector<32x8xbf16>, vector<8x256xbf16>, vector<32x256xf32> -> vector<32x256xf32>
    %c0_4 = arith.constant 0 : index
    %c0_5 = arith.constant 0 : index
    %5 = vector.load %arg4[%c0_4, %c0_5] : memref<32x1xf32, #tpu.memory_space<vmem>>, vector<32x1xf32>
    %6 = vector.broadcast %5 : vector<32x1xf32> to vector<32x256xf32>
    %7 = arith.addf %4, %6 : vector<32x256xf32>
    %cst_6 = arith.constant 0.000000e+00 : f32
    %8 = vector.broadcast %cst_6 : f32 to vector<32x256xf32>
    %9 = arith.maximumf %7, %8 : vector<32x256xf32>
    %10 = vector.shape_cast %9 : vector<32x256xf32> to vector<1x32x256xf32>
    %c0_7 = arith.constant 0 : index
    %c0_8 = arith.constant 0 : index
    %c0_9 = arith.constant 0 : index
    %11 = vector.load %arg5[%c0_7, %c0_8, %c0_9] : memref<1x32x256xf32, #tpu.memory_space<vmem>>, vector<1x32x256xf32>
    tpu.vector_store %arg5[%c0_7, %c0_8, %c0_9], %10 {strides = array<i32>} : memref<1x32x256xf32, #tpu.memory_space<vmem>>, vector<1x32x256xf32>,
    return
  }
  func.func @transform_0(%arg0: i32, %arg1: i32) -> (i32, i32, i32) {
    %c0_i32 = arith.constant 0 : i32
    %c0_i32_0 = arith.constant 0 : i32
    return %arg0, %c0_i32, %arg1 : i32, i32, i32
  }
  func.func @transform_1(%arg0: i32, %arg1: i32) -> (i32, i32) {
    %c0_i32 = arith.constant 0 : i32
    %c0_i32_0 = arith.constant 0 : i32
    %c0_i32_1 = arith.constant 0 : i32
    return %c0_i32, %c0_i32_0 : i32, i32
  }
  func.func @transform_2(%arg0: i32, %arg1: i32) -> (i32, i32) {
    %c0_i32 = arith.constant 0 : i32
    %c0_i32_0 = arith.constant 0 : i32
    %c0_i32_1 = arith.constant 0 : i32
    return %c0_i32, %c0_i32_0 : i32, i32
  }
  func.func @transform_3(%arg0: i32, %arg1: i32) -> (i32, i32, i32) {
    %c0_i32 = arith.constant 0 : i32
    %c0_i32_0 = arith.constant 0 : i32
    return %arg0, %c0_i32, %arg1 : i32, i32, i32
  }
}

</mosaic_0001>

<llo_original>
// kernel: tpu_custom_call.1
$region0: #{tpu_custom_call.1}
  #allocation0 [shape = 'u32[]', space=smem, size = 0x4, offset = 0x4, fixed_abs, tag = 'smem constant byte address 0x4 - core index']
  #allocation1 [shape = 'u32[72,128]{1,0:T(1,128)}', space=vmem, size = 0x9000, scoped, tag = 'internal scratch']
  %s0 = inlined_call_operand.vmem [shape: f32[2,8,256], index: 0, kind: input, shape index: {}]
  %s1 = inlined_call_operand.vmem [shape: bf16[32,8], index: 1, kind: input, shape index: {}]
  %s2 = inlined_call_operand.vmem [shape: f32[32,1], index: 2, kind: input, shape index: {}]
  %s3 = inlined_call_operand.hbm [shape: f32[2,32,256], index: 3, kind: output, shape index: {}]
  %s4 = sld [smem:[#allocation0]]
  $region45: #{tpu_custom_call.1} parent=0
    _
  %s6 = ssub.s32 1, %s4
  %s7 = scalar_select 0, %s6, %s4
  $region1: #{tpu_custom_call.1} parent=0
    #allocation2 [shape = 'u8[65536]{0}', space=vmem, size = 0x10000, scoped, tag = 'output window, operand 0']
    #allocation3 [shape = 's32[2]{0}', space=sflag, size = 0x8, scoped, tag = 'scoped memory for tpu_custom_call.1']
    %8 = vsyncpa [#allocation3], 0
    %s9 = scalar_lea.sflag [#allocation3], 1
    %10 = vsyncpa %s9, 0
    loop: start=0, step=1, limit=4
    $region2: #{tpu_custom_call.1} parent=1 // loop_pre_header
      _
    $region3: #{tpu_custom_call.1} parent=1 // loop_header
      %s12 = sphi 0, %s16
      %p13 = scmp.ge.s32.totalorder %s12, 4
      %s19 = sphi 0, %s31
      %s20 = sphi 0, %s27
      %s21 = sphi 0, %s19
      %s22 = sphi 0, %s20
      %s23 = sphi 0, %s21
      %s24 = sphi 0, %s22
      %s36 = sphi 0, %s38
      %s39 = sphi 0, %s36
      %s40 = sphi 0, %s39
      %s56 = sphi 0, %s40
      %s60 = sphi 0, %s60
      %s62 = sphi 0, %s60
      %s63 = sphi 0, %s62
      %s77 = sphi 0, %s63
      %s81 = sphi 0, %s81
      %s83 = sphi 0, %s81
      %s84 = sphi 0, %s83
      %s98 = sphi 0, %s84
      %s106 = sphi 0, %s108
      %s109 = sphi 0, %s106
      %s110 = sphi 0, %s109
      %s126 = sphi 0, %s110
    $region4: #{tpu_custom_call.1} parent=1 // loop_header_branch
      %15 = sbr.rel (%p13) target = $region8
    $region5: #{tpu_custom_call.1} parent=1 // loop_body
      %s17 = ssub.s32 %s12, 1
      %s18 = ssub.s32 %s12, 2
      %s25 = sadd.s32 1, %s20
      %p26 = scmp.ge.s32.totalorder %s25, 1
      %s27 = scalar_select %p26, 0, %s25
      %s28 = sadd.s32 1, %s19
      %s29 = scalar_select %p26, %s28, %s19
      %p30 = scmp.ge.s32.totalorder %s29, 2
      %s31 = scalar_select %p30, 0, %s29
      %s32 = ssub.s32 %s19, %s31
      %s33 = ssub.s32 %s20, %s27
      %s34 = sor.u32 %s32, %s33
      %p35 = scmp.eq.s32.totalorder %s34, 0
      %s37 = sadd.s32 %s36, 1
      %s38 = scalar_select %p35, %s36, %s37
      %p41 = pneg %p35
      %p42 = scmp.eq.s32.totalorder %s12, 1
      %p43 = por %p41, %p42
      %p44 = scmp.ne.s32.totalorder %s36, %s39
      %p45 = scmp.eq.s32.totalorder %s12, 0
      %p46 = por %p44, %p45
      %p47 = scmp.ne.s32.totalorder %s36, %s39
      %p48 = scmp.eq.s32.totalorder %s17, 1
      %p49 = por %p47, %p48
      %p50 = scmp.ne.s32.totalorder %s39, %s40
      %p51 = scmp.eq.s32.totalorder %s17, 0
      %p52 = por %p50, %p51
      %p53 = scmp.ne.s32.totalorder %s39, %s40
      %p54 = scmp.eq.s32.totalorder %s18, 1
      %p55 = por %p53, %p54
      %p57 = scmp.ne.s32.totalorder %s40, %s56
      %p58 = scmp.eq.s32.totalorder %s18, 0
      %p59 = por %p57, %p58
      %s61 = sadd.s32 %s60, 1
      %p64 = scmp.eq.s32.totalorder %s12, 1
      %p65 = scmp.ne.s32.totalorder %s60, %s62
      %p66 = scmp.eq.s32.totalorder %s12, 0
      %p67 = por %p65, %p66
      %p68 = scmp.ne.s32.totalorder %s60, %s62
      %p69 = scmp.eq.s32.totalorder %s17, 1
      %p70 = por %p68, %p69
      %p71 = scmp.ne.s32.totalorder %s62, %s63
      %p72 = scmp.eq.s32.totalorder %s17, 0
      %p73 = por %p71, %p72
      %p74 = scmp.ne.s32.totalorder %s62, %s63
      %p75 = scmp.eq.s32.totalorder %s18, 1
      %p76 = por %p74, %p75
      %p78 = scmp.ne.s32.totalorder %s63, %s77
      %p79 = scmp.eq.s32.totalorder %s18, 0
      %p80 = por %p78, %p79
      %s82 = sadd.s32 %s81, 1
      %p85 = scmp.eq.s32.totalorder %s12, 1
      %p86 = scmp.ne.s32.totalorder %s81, %s83
      %p87 = scmp.eq.s32.totalorder %s12, 0
      %p88 = por %p86, %p87
      %p89 = scmp.ne.s32.totalorder %s81, %s83
      %p90 = scmp.eq.s32.totalorder %s17, 1
      %p91 = por %p89, %p90
      %p92 = scmp.ne.s32.totalorder %s83, %s84
      %p93 = scmp.eq.s32.totalorder %s17, 0
      %p94 = por %p92, %p93
      %p95 = scmp.ne.s32.totalorder %s83, %s84
      %p96 = scmp.eq.s32.totalorder %s18, 1
      %p97 = por %p95, %p96
      %p99 = scmp.ne.s32.totalorder %s84, %s98
      %p100 = scmp.eq.s32.totalorder %s18, 0
      %p101 = por %p99, %p100
      %s102 = ssub.s32 %s19, %s31
      %s103 = ssub.s32 %s20, %s27
      %s104 = sor.u32 %s102, %s103
      %p105 = scmp.eq.s32.totalorder %s104, 0
      %s107 = sadd.s32 %s106, 1
      %s108 = scalar_select %p105, %s106, %s107
      %p111 = pneg %p105
      %p112 = scmp.eq.s32.totalorder %s12, 1
      %p113 = por %p111, %p112
      %p114 = scmp.ne.s32.totalorder %s106, %s109
      %p115 = scmp.eq.s32.totalorder %s12, 0
      %p116 = por %p114, %p115
      %p117 = scmp.ne.s32.totalorder %s106, %s109
      %p118 = scmp.eq.s32.totalorder %s17, 1
      %p119 = por %p117, %p118
      %p120 = scmp.ne.s32.totalorder %s109, %s110
      %p121 = scmp.eq.s32.totalorder %s17, 0
      %p122 = por %p120, %p121
      %p123 = scmp.ne.s32.totalorder %s109, %s110
      %p124 = scmp.eq.s32.totalorder %s18, 1
      %p125 = por %p123, %p124
      %p127 = scmp.ne.s32.totalorder %s110, %s126
      %p128 = scmp.eq.s32.totalorder %s18, 0
      %p129 = por %p127, %p128
      %p130 = scmp.le.s32.totalorder 1, %s12
      %p131 = scmp.lt.s32.totalorder %s12, 3
      %p132 = pnand %p130, %p131
      %p133 = pneg %p132
      // Predicated region
      $region9: #{tpu_custom_call.1} parent=5 // pred_check
        _
      $region10: #{tpu_custom_call.1} parent=5 // pred_check_branch
        %135 = sbr.rel (%p132) target = $region12
      $region11: #{tpu_custom_call.1} parent=5 // pred_region
        %s136 = ssub.s32 %s12, 1
        // Predicated region
        $region13: #{tpu_custom_call.1} parent=11 // pred_check
          %p137 = pneg %p73
        $region14: #{tpu_custom_call.1} parent=11 // pred_check_branch
          %139 = sbr.rel (%p137) target = $region16
        $region15: #{tpu_custom_call.1} parent=11 // pred_region
          _
        $region16: #{tpu_custom_call.1} parent=11 // pred_fallthru
          _
        // Predicated region
        $region17: #{tpu_custom_call.1} parent=11 // pred_check
          %p140 = pneg %p94
        $region18: #{tpu_custom_call.1} parent=11 // pred_check_branch
          %142 = sbr.rel (%p140) target = $region20
        $region19: #{tpu_custom_call.1} parent=11 // pred_region
          _
        $region20: #{tpu_custom_call.1} parent=11 // pred_fallthru
          _
      $region12: #{tpu_custom_call.1} parent=5 // pred_fallthru
        _
      %p143 = scmp.lt.s32.totalorder %s12, 2
      // Predicated region
      $region21: #{tpu_custom_call.1} parent=5 // pred_check
        %p144 = pneg %p143
      $region22: #{tpu_custom_call.1} parent=5 // pred_check_branch
        %146 = sbr.rel (%p144) target = $region24
      $region23: #{tpu_custom_call.1} parent=5 // pred_region
        // Predicated region
        $region25: #{tpu_custom_call.1} parent=23 // pred_check
          %p147 = pneg %p46
        $region26: #{tpu_custom_call.1} parent=23 // pred_check_branch
          %149 = sbr.rel (%p147) target = $region28
        $region27: #{tpu_custom_call.1} parent=23 // pred_region
          %s150 = smul.u32 2, %s20
          %p151 = scmp.lt.s32.totalorder %s19, 1
          %s152 = scalar_select %p151, %s19, 1
          %p153 = scmp.lt.s32.totalorder %s150, 1
          %s154 = scalar_select %p153, %s150, 1
          %s155 = smul.addr %s152, 2
          %s156 = sadd.s32 %s154, %s155
          %s157 = smul.addr %s156, 8
          %s158 = scalar_lea.vmem %s0, %s157
          %s159 = smul.u32 2, %s20
        $region28: #{tpu_custom_call.1} parent=23 // pred_fallthru
          _
      $region24: #{tpu_custom_call.1} parent=5 // pred_fallthru
        _
      %p160 = scmp.le.s32.totalorder 1, %s12
      %p161 = scmp.lt.s32.totalorder %s12, 3
      %p162 = pnand %p160, %p161
      %p163 = pneg %p162
      // Predicated region
      $region29: #{tpu_custom_call.1} parent=5 // pred_check
        _
      $region30: #{tpu_custom_call.1} parent=5 // pred_check_branch
        %165 = sbr.rel (%p162) target = $region32
      $region31: #{tpu_custom_call.1} parent=5 // pred_region
        %s166 = ssub.s32 %s12, 1
        %s167 = smul.u32 2, %s22
        %p168 = scmp.lt.s32.totalorder %s21, 1
        %s169 = scalar_select %p168, %s21, 1
        %p170 = scmp.lt.s32.totalorder %s167, 1
        %s171 = scalar_select %p170, %s167, 1
        %s172 = smul.addr %s169, 2
        %s173 = sadd.s32 %s171, %s172
        %s174 = smul.addr %s173, 8
        %s175 = scalar_lea.vmem %s0, %s174
        %p176 = pneg %p52
        %p177 = pneg %p49
        %p178 = pneg %p73
        %p179 = pneg %p70
        %p180 = pneg %p94
        %p181 = pneg %p91
        %p182 = pneg %p122
        %p183 = pneg %p119
        %s184 = sand.u32 %s109, 1
        %s185 = scalar_lea.sflag [#allocation3], %s184
        %s186 = sand.u32 %s109, 1
        %s187 = smul.addr %s186, 64
        %s188 = scalar_lea.vmem [#allocation2], %s187
        %s189 = smul.u32 2, %s22
        %p190 = scmp.lt.s32.totalorder %s21, 1
        %s191 = scalar_select %p190, %s21, 1
        %p192 = scmp.lt.s32.totalorder %s189, 1
        %s193 = scalar_select %p192, %s189, 1
        %s194 = smul.addr %s191, 2
        %s195 = sadd.s32 %s193, %s194
        %s196 = smul.addr %s195, 8
        %s197 = scalar_lea.vmem %s0, %s196
        %s198 = smul.u32 2, %s22
        %s199 = smul.u32 2, %s22
        %v201 = vld [vmem:[%s1] sm:$0xf]
        %v202 = vld [vmem:[%s1 + $0x4] sm:$0xf]
        %v203 = vld [vmem:[%s1 + $0x8] sm:$0xf]
        %v204 = vld [vmem:[%s1 + $0xc] sm:$0xf]
        %v205 = vld [vmem:[%s197] sm:$0xff]
        %v206 = vld [vmem:[%s197 + $0x8] sm:$0xff]
        %v207 = vpack.c.bf16 %v205, %v205
        %v208 = vpack.c.bf16 %v206, %v206
        %v209 = vld [vmem:[%s2] sm:$0xff]
        %v210 = vld [vmem:[%s2 + $0x8] sm:$0xff]
        %v211 = vld [vmem:[%s2 + $0x10] sm:$0xff]
        %v212 = vld [vmem:[%s2 + $0x18] sm:$0xff]
        %214 = vset.pattern.permute.xlu0 0
        %215 = vperm.xlu0 %214, %v209
        %v216 = vpop.permute.xlu0 %215
        %219 = vset.pattern.permute.xlu0 0
        %220 = vperm.xlu0 %219, %v210
        %v221 = vpop.permute.xlu0 %220
        %224 = vset.pattern.permute.xlu0 0
        %225 = vperm.xlu0 %224, %v211
        %v226 = vpop.permute.xlu0 %225
        %229 = vset.pattern.permute.xlu0 0
        %230 = vperm.xlu0 %229, %v212
        %v231 = vpop.permute.xlu0 %230
        %v237 = vunpack.c.l.b16 %v201
        %v238 = vunpack.c.l.b16 %v202
        %v239 = vunpack.c.l.b16 %v203
        %v240 = vunpack.c.l.b16 %v204
        %v241 = vpack.c.b16 %v238, %v237
        %v242 = vpack.c.b16 %v240, %v239
        %vm243 = vcmask 64512
        %v245 = vsel %vm243, %v241, 0
        %v248 = vsel %vm243, %v242, 0
        %vm250 = vcmask 1043456
        %v252 = vsel %vm250, %v207, 0
        %v255 = vsel %vm250, %v208, 0
        %257 = vmatpush.bf16.msra.mxu0 0
        %258 = vmatpush.bf16.msra.mxu0 0
        %259 = vmatpush.bf16.msra.mxu0 0
        %260 = vmatpush.bf16.msra.mxu0 0
        %261 = vmatpush.bf16.msra.mxu0 0
        %262 = vmatpush.bf16.msra.mxu0 0
        %263 = vmatpush.bf16.msra.mxu0 0
        %264 = vmatpush.bf16.msra.mxu0 %v252
        %265 = vmatmul.bf16.gmra.mxu0 %v245
        %v266 = vpop.f32.mrf.mxu0
        %v267 = vadd.f32 %v216, %v266
        %v268 = vpop.f32.mrf.mxu0
        %v269 = vadd.f32 %v221, %v268
        %270 = vmatmul.bf16.gmra.mxu0 %v248
        %v271 = vpop.f32.mrf.mxu0
        %v272 = vadd.f32 %v226, %v271
        %v273 = vpop.f32.mrf.mxu0
        %v274 = vadd.f32 %v231, %v273
        %275 = vdwg.mxu0
        %276 = vmatpush.bf16.msra.mxu0 0
        %277 = vmatpush.bf16.msra.mxu0 0
        %278 = vmatpush.bf16.msra.mxu0 0
        %279 = vmatpush.bf16.msra.mxu0 0
        %280 = vmatpush.bf16.msra.mxu0 0
        %281 = vmatpush.bf16.msra.mxu0 0
        %282 = vmatpush.bf16.msra.mxu0 0
        %283 = vmatpush.bf16.msra.mxu0 %v255
        %284 = vmatmul.bf16.gmra.mxu0 %v245
        %v285 = vpop.f32.mrf.mxu0
        %v286 = vadd.f32 %v216, %v285
        %v287 = vpop.f32.mrf.mxu0
        %v288 = vadd.f32 %v221, %v287
        %289 = vmatmul.bf16.gmra.mxu0 %v248
        %v290 = vpop.f32.mrf.mxu0
        %v291 = vadd.f32 %v226, %v290
        %v292 = vpop.f32.mrf.mxu0
        %v293 = vadd.f32 %v231, %v292
        %294 = vdwg.mxu0
        %v295 = vmax.f32 %v267, 0.0
        %v296 = vmax.f32 %v286, 0.0
        %v297 = vmax.f32 %v269, 0.0
        %v298 = vmax.f32 %v288, 0.0
        %v299 = vmax.f32 %v272, 0.0
        %v300 = vmax.f32 %v291, 0.0
        %v301 = vmax.f32 %v274, 0.0
        %v302 = vmax.f32 %v293, 0.0
        %303 = vst [vmem:[%s188] sm:$0xff] %v295
        %304 = vst [vmem:[%s188 + $0x8] sm:$0xff] %v296
        %305 = vst [vmem:[%s188 + $0x10] sm:$0xff] %v297
        %306 = vst [vmem:[%s188 + $0x18] sm:$0xff] %v298
        %307 = vst [vmem:[%s188 + $0x20] sm:$0xff] %v299
        %308 = vst [vmem:[%s188 + $0x28] sm:$0xff] %v300
        %309 = vst [vmem:[%s188 + $0x30] sm:$0xff] %v301
        %310 = vst [vmem:[%s188 + $0x38] sm:$0xff] %v302
        %s311 = sand.u32 %s109, 1
        %s312 = scalar_lea.sflag [#allocation3], %s311
        %s313 = sand.u32 %s109, 1
        %s314 = smul.addr %s313, 64
        %s315 = scalar_lea.vmem [#allocation2], %s314
        // Predicated region
        $region33: #{tpu_custom_call.1} parent=31 // pred_check
          %p316 = pneg %p119
        $region34: #{tpu_custom_call.1} parent=31 // pred_check_branch
          %318 = sbr.rel (%p316) target = $region36
        $region35: #{tpu_custom_call.1} parent=31 // pred_region
          %s319 = smul.u32 2, %s22
          %321 = vsyncadd %s312, 0
          %s322 = smul.addr %s21, 8
          %s323 = sadd.s32 %s319, %s322
          %s324 = smul.addr %s323, 8
          %s325 = scalar_lea.hbm %s3, %s324
          %s326 = sshll.u32 %s315, 4
          %s327 = int_to_ptr.vmem [resolvable:$true] %s326
          %s328 = sshll.u32 %s325, 4
          %s329 = int_to_ptr.hbm [resolvable:$true] %s328
          %334 = dma.vmem_to_hbm [thread:$0]  %s327, 1024, %s329, %s312, 256, 256, 16
        $region36: #{tpu_custom_call.1} parent=31 // pred_fallthru
          _
      $region32: #{tpu_custom_call.1} parent=5 // pred_fallthru
        _
      %p335 = scmp.le.s32.totalorder 2, %s12
      // Predicated region
      $region37: #{tpu_custom_call.1} parent=5 // pred_check
        %p336 = pneg %p335
      $region38: #{tpu_custom_call.1} parent=5 // pred_check_branch
        %338 = sbr.rel (%p336) target = $region40
      $region39: #{tpu_custom_call.1} parent=5 // pred_region
        %s339 = ssub.s32 %s12, 2
        // Predicated region
        $region41: #{tpu_custom_call.1} parent=39 // pred_check
          %p340 = pneg %p125
        $region42: #{tpu_custom_call.1} parent=39 // pred_check_branch
          %342 = sbr.rel (%p340) target = $region44
        $region43: #{tpu_custom_call.1} parent=39 // pred_region
          %s343 = sand.u32 %s110, 1
          %s344 = scalar_lea.sflag [#allocation3], %s343
          %s345 = sand.u32 %s110, 1
          %s346 = smul.addr %s345, 64
          %s347 = scalar_lea.vmem [#allocation2], %s346
          %349 = dma.done %s344, 1024
        $region44: #{tpu_custom_call.1} parent=39 // pred_fallthru
          _
      $region40: #{tpu_custom_call.1} parent=5 // pred_fallthru
        _
    $region6: #{tpu_custom_call.1} parent=1 // loop_footer
      %s16 = sadd.s32 1, %s12
    $region7: #{tpu_custom_call.1} parent=1 // loop_footer_branch
      %11 = sbr.rel target = $region3
    $region8: #{tpu_custom_call.1} parent=1 // loop_exit
      _
    %350 = vsyncpa [#allocation3], 1
    %s351 = scalar_lea.sflag [#allocation3], 1
    %352 = vsyncpa %s351, 1

</llo_original>
